<compile_context>
chip_gen: v5e
topology: v5e:2x2
jax: 0.10.0
libtpu: 0.0.40
codegen_flags: <defaults>
</compile_context>

<pallas_src>
import jax
import jax.numpy as jnp
from jax.experimental import pallas as pl
from jax.experimental.pallas import tpu as pltpu


def _round_up(x, m):
    return ((x + m - 1) // m) * m


def _fusion_kernel(g_ref,                   # SMEM (1,1) f32 : sigmoid(gate), precomputed
                   text_ref, topic_ref,     # VMEM (tm, H) f32
                   w_t2p_ref, b_t2p_ref,    # VMEM (H, H) bf16, (1, H) f32
                   w_p2t_ref, b_p2t_ref,    # VMEM (H, H) bf16, (1, H) f32
                   etext_ref, etopic_ref):  # VMEM (tm, H) f32 outputs
    g = g_ref[0, 0]
    one_minus_g = 1.0 - g

    text_f32 = text_ref[...]
    topic_f32 = topic_ref[...]

    # bf16 operands into the MXU, f32 accumulation; bias added once in f32.
    text_for_topics = (
        jnp.dot(text_f32.astype(jnp.bfloat16), w_t2p_ref[...],
                preferred_element_type=jnp.float32)
        + b_t2p_ref[...]
    )
    topics_for_text = (
        jnp.dot(topic_f32.astype(jnp.bfloat16), w_p2t_ref[...],
                preferred_element_type=jnp.float32)
        + b_p2t_ref[...]
    )

    # Residual + gate blend in f32 (VPU work hides under the MXU / DMA).
    etext_ref[...] = (text_f32 + g * topics_for_text).astype(etext_ref.dtype)
    etopic_ref[...] = (topic_f32 + one_minus_g * text_for_topics).astype(etopic_ref.dtype)


def bidirectional_fusion(text, topic, w_t2p, b_t2p, w_p2t, b_p2t, gate,
                         *, tm=1024):
    """text, topic: (N, H) f32.  w_*: (H, H) as (in, out).  b_*: (H,).  gate: scalar."""
    N, H = text.shape

    # Row tile: big for HBM-roofline efficiency, but
    #   (a) never (much) larger than the problem itself, and
    #   (b) small enough that the grid has >= 2 parallel steps whenever N
    #       allows it, so v7x's two TensorCores both get rows.
    tm = max(8, min(tm, _round_up(N, 8)))
    if N > 8:
        tm = min(tm, max(8, _round_up(pl.cdiv(N, 2), 8)))

    grid = (pl.cdiv(N, tm),)   # ragged last block: OOB reads are per-row
                               # garbage only, OOB writes are dropped.

    # sigmoid hoisted out of the kernel; raw gate param -> squashed gate.
    g_arr = jax.nn.sigmoid(jnp.asarray(gate, jnp.float32)).reshape(1, 1)

    w_t2p_bf = w_t2p.astype(jnp.bfloat16)
    w_p2t_bf = w_p2t.astype(jnp.bfloat16)
    b_t2p2 = b_t2p.astype(jnp.float32).reshape(1, H)
    b_p2t2 = b_p2t.astype(jnp.float32).reshape(1, H)

    row_spec = pl.BlockSpec((tm, H), lambda i: (i, 0))
    w_spec = pl.BlockSpec((H, H), lambda i: (0, 0))   # constant index -> resident
    b_spec = pl.BlockSpec((1, H), lambda i: (0, 0))

    out_shape = (
        jax.ShapeDtypeStruct((N, H), jnp.float32),
        jax.ShapeDtypeStruct((N, H), jnp.float32),
    )

    etext, etopic = pl.pallas_call(
        _fusion_kernel,
        out_shape=out_shape,
        grid=grid,
        in_specs=[
            pl.BlockSpec(memory_space=pltpu.SMEM),  # sigmoid(gate) scalar
            row_spec,   # text rows
            row_spec,   # topic rows
            w_spec,     # W_t2p (bf16, resident)
            b_spec,     # b_t2p
            w_spec,     # W_p2t (bf16, resident)
            b_spec,     # b_p2t
        ],
        out_specs=(row_spec, row_spec),
        compiler_params=pltpu.CompilerParams(
            dimension_semantics=("parallel",)),
    )(g_arr, text, topic, w_t2p_bf, b_t2p2, w_p2t_bf, b_p2t2)

    return etext, etopic


def reference(text, topic, w_t2p, b_t2p, w_p2t, b_p2t, gate):
    text_for_topics = text @ w_t2p + b_t2p
    topics_for_text = topic @ w_p2t + b_p2t
    g = jax.nn.sigmoid(gate)
    return (text + g * topics_for_text,
            topic + (1.0 - g) * text_for_topics)


if __name__ == "__main__":
    # Small shapes consistent with the module: batch=2, seq=8, hidden=128.
    B, S, H = 2, 8, 128
    N = B * S

    key = jax.random.PRNGKey(0)
    k_text, k_topic, k_w1, k_b1, k_w2, k_b2 = jax.random.split(key, 6)

    text = jax.random.normal(k_text, (N, H), jnp.float32)
    topic = jax.random.normal(k_topic, (N, H), jnp.float32)

    # Deterministic parameter init (weights stored as (in, out) = torch W.T).
    w_t2p = jax.random.normal(k_w1, (H, H), jnp.float32) * 0.02
    b_t2p = jax.random.normal(k_b1, (H,), jnp.float32) * 0.02
    w_p2t = jax.random.normal(k_w2, (H, H), jnp.float32) * 0.02
    b_p2t = jax.random.normal(k_b2, (H,), jnp.float32) * 0.02
    gate = jnp.float32(0.5)

    enh_text, enh_topic = bidirectional_fusion(
        text, topic, w_t2p, b_t2p, w_p2t, b_p2t, gate)
    jax.block_until_ready((enh_text, enh_topic))

    ref_text, ref_topic = reference(text, topic, w_t2p, b_t2p, w_p2t, b_p2t, gate)
    # bf16 MXU operands (f32 accumulation) -> loosen tolerance vs. pure-f32 ref.
    assert enh_text.shape == ref_text.shape and enh_topic.shape == ref_topic.shape
    assert jnp.allclose(enh_text, ref_text, atol=1e-2, rtol=1e-2)
    assert jnp.allclose(enh_topic, ref_topic, atol=1e-2, rtol=1e-2)

    print("KERNEL_OK")
</pallas_src>

<mosaic_0001>
module attributes {stable_mosaic.version = 11 : i64} {
  func.func @_fusion_kernel(%arg0: i32, %arg1: memref<1x1xf32, #tpu.memory_space<smem>>, %arg2: memref<8x128xf32, #tpu.memory_space<vmem>>, %arg3: memref<8x128xf32, #tpu.memory_space<vmem>>, %arg4: memref<128x128xbf16, #tpu.memory_space<vmem>>, %arg5: memref<1x128xf32, #tpu.memory_space<vmem>>, %arg6: memref<128x128xbf16, #tpu.memory_space<vmem>>, %arg7: memref<1x128xf32, #tpu.memory_space<vmem>>, %arg8: memref<8x128xf32, #tpu.memory_space<vmem>>, %arg9: memref<8x128xf32, #tpu.memory_space<vmem>>) attributes {dimension_semantics = [#tpu.dimension_semantics<parallel>], iteration_bounds = array<i64: 2>, scalar_prefetch = 0 : i64, scratch_operands = 0 : i64, tpu.core_type = #tpu.core_type<tc>, window_params = [{transform_indices = @transform_0, window_bounds = array<i64: 1, 1>}, {transform_indices = @transform_1, window_bounds = array<i64: 8, 128>}, {transform_indices = @transform_2, window_bounds = array<i64: 8, 128>}, {pipeline_mode = #tpu.pipeline_mode<synchronous>, transform_indices = @transform_3, window_bounds = array<i64: 128, 128>}, {pipeline_mode = #tpu.pipeline_mode<synchronous>, transform_indices = @transform_4, window_bounds = array<i64: 1, 128>}, {pipeline_mode = #tpu.pipeline_mode<synchronous>, transform_indices = @transform_5, window_bounds = array<i64: 128, 128>}, {pipeline_mode = #tpu.pipeline_mode<synchronous>, transform_indices = @transform_6, window_bounds = array<i64: 1, 128>}, {transform_indices = @transform_7, window_bounds = array<i64: 8, 128>}, {transform_indices = @transform_8, window_bounds = array<i64: 8, 128>}]} {
    %c0 = arith.constant 0 : index
    %c0_0 = arith.constant 0 : index
    %0 = memref.load %arg1[%c0, %c0_0] : memref<1x1xf32, #tpu.memory_space<smem>>
    %cst = arith.constant 1.000000e+00 : f32
    %1 = arith.subf %cst, %0 : f32
    %c0_1 = arith.constant 0 : index
    %c0_2 = arith.constant 0 : index
    %2 = vector.load %arg2[%c0_1, %c0_2] : memref<8x128xf32, #tpu.memory_space<vmem>>, vector<8x128xf32>
    %c0_3 = arith.constant 0 : index
    %c0_4 = arith.constant 0 : index
    %3 = vector.load %arg3[%c0_3, %c0_4] : memref<8x128xf32, #tpu.memory_space<vmem>>, vector<8x128xf32>
    %4 = arith.truncf %2 : vector<8x128xf32> to vector<8x128xbf16>
    %c0_5 = arith.constant 0 : index
    %c0_6 = arith.constant 0 : index
    %5 = vector.load %arg4[%c0_5, %c0_6] : memref<128x128xbf16, #tpu.memory_space<vmem>>, vector<128x128xbf16>
    %cst_7 = arith.constant dense<0.000000e+00> : vector<8x128xf32>
    %6 = tpu.matmul %4, %5, %cst_7 {dimension_numbers = #tpu.dot_dimension_numbers<[1], [0], [0], [1], [0, 0, 1, 1], [], []>} : vector<8x128xbf16>, vector<128x128xbf16>, vector<8x128xf32> -> vector<8x128xf32>
    %c0_8 = arith.constant 0 : index
    %c0_9 = arith.constant 0 : index
    %7 = vector.load %arg5[%c0_8, %c0_9] : memref<1x128xf32, #tpu.memory_space<vmem>>, vector<1x128xf32>
    %8 = vector.broadcast %7 : vector<1x128xf32> to vector<8x128xf32>
    %9 = arith.addf %6, %8 : vector<8x128xf32>
    %10 = arith.truncf %3 : vector<8x128xf32> to vector<8x128xbf16>
    %c0_10 = arith.constant 0 : index
    %c0_11 = arith.constant 0 : index
    %11 = vector.load %arg6[%c0_10, %c0_11] : memref<128x128xbf16, #tpu.memory_space<vmem>>, vector<128x128xbf16>
    %cst_12 = arith.constant dense<0.000000e+00> : vector<8x128xf32>
    %12 = tpu.matmul %10, %11, %cst_12 {dimension_numbers = #tpu.dot_dimension_numbers<[1], [0], [0], [1], [0, 0, 1, 1], [], []>} : vector<8x128xbf16>, vector<128x128xbf16>, vector<8x128xf32> -> vector<8x128xf32>
    %c0_13 = arith.constant 0 : index
    %c0_14 = arith.constant 0 : index
    %13 = vector.load %arg7[%c0_13, %c0_14] : memref<1x128xf32, #tpu.memory_space<vmem>>, vector<1x128xf32>
    %14 = vector.broadcast %13 : vector<1x128xf32> to vector<8x128xf32>
    %15 = arith.addf %12, %14 : vector<8x128xf32>
    %16 = vector.broadcast %0 : f32 to vector<8x128xf32>
    %17 = arith.mulf %16, %15 : vector<8x128xf32>
    %18 = arith.addf %2, %17 : vector<8x128xf32>
    %c0_15 = arith.constant 0 : index
    %c0_16 = arith.constant 0 : index
    %19 = vector.load %arg8[%c0_15, %c0_16] : memref<8x128xf32, #tpu.memory_space<vmem>>, vector<8x128xf32>
    tpu.vector_store %arg8[%c0_15, %c0_16], %18 {strides = array<i32>} : memref<8x128xf32, #tpu.memory_space<vmem>>, vector<8x128xf32>,
    %20 = vector.broadcast %1 : f32 to vector<8x128xf32>
    %21 = arith.mulf %20, %9 : vector<8x128xf32>
    %22 = arith.addf %3, %21 : vector<8x128xf32>
    %c0_17 = arith.constant 0 : index
    %c0_18 = arith.constant 0 : index
    %23 = vector.load %arg9[%c0_17, %c0_18] : memref<8x128xf32, #tpu.memory_space<vmem>>, vector<8x128xf32>
    tpu.vector_store %arg9[%c0_17, %c0_18], %22 {strides = array<i32>} : memref<8x128xf32, #tpu.memory_space<vmem>>, vector<8x128xf32>,
    return
  }
  func.func @transform_0(%arg0: i32) -> (i32, i32) {
    %c0_i32 = arith.constant 0 : i32
    %c0_i32_0 = arith.constant 0 : i32
    %c0_i32_1 = arith.constant 0 : i32
    return %c0_i32, %c0_i32_0 : i32, i32
  }
  func.func @transform_1(%arg0: i32) -> (i32, i32) {
    %c0_i32 = arith.constant 0 : i32
    %c0_i32_0 = arith.constant 0 : i32
    return %arg0, %c0_i32 : i32, i32
  }
  func.func @transform_2(%arg0: i32) -> (i32, i32) {
    %c0_i32 = arith.constant 0 : i32
    %c0_i32_0 = arith.constant 0 : i32
    return %arg0, %c0_i32 : i32, i32
  }
  func.func @transform_3(%arg0: i32) -> (i32, i32) {
    %c0_i32 = arith.constant 0 : i32
    %c0_i32_0 = arith.constant 0 : i32
    %c0_i32_1 = arith.constant 0 : i32
    return %c0_i32, %c0_i32_0 : i32, i32
  }
  func.func @transform_4(%arg0: i32) -> (i32, i32) {
    %c0_i32 = arith.constant 0 : i32
    %c0_i32_0 = arith.constant 0 : i32
    %c0_i32_1 = arith.constant 0 : i32
    return %c0_i32, %c0_i32_0 : i32, i32
  }
  func.func @transform_5(%arg0: i32) -> (i32, i32) {
    %c0_i32 = arith.constant 0 : i32
    %c0_i32_0 = arith.constant 0 : i32
    %c0_i32_1 = arith.constant 0 : i32
    return %c0_i32, %c0_i32_0 : i32, i32
  }
  func.func @transform_6(%arg0: i32) -> (i32, i32) {
    %c0_i32 = arith.constant 0 : i32
    %c0_i32_0 = arith.constant 0 : i32
    %c0_i32_1 = arith.constant 0 : i32
    return %c0_i32, %c0_i32_0 : i32, i32
  }
  func.func @transform_7(%arg0: i32) -> (i32, i32) {
    %c0_i32 = arith.constant 0 : i32
    %c0_i32_0 = arith.constant 0 : i32
    return %arg0, %c0_i32 : i32, i32
  }
  func.func @transform_8(%arg0: i32) -> (i32, i32) {
    %c0_i32 = arith.constant 0 : i32
    %c0_i32_0 = arith.constant 0 : i32
    return %arg0, %c0_i32 : i32, i32
  }
}

</mosaic_0001>

<llo_original>
// kernel: tpu_custom_call.1
$region0: #{tpu_custom_call.1}
  #allocation0 [shape = 'u32[]', space=smem, size = 0x4, offset = 0x4, fixed_abs, tag = 'smem constant byte address 0x4 - core index']
  #allocation1 [shape = 'u32[72,128]{1,0:T(1,128)}', space=vmem, size = 0x9000, scoped, tag = 'internal scratch']
  #allocation2 [shape = 'f32[1,1]{1,0:T(1,128)S(6)}', space=smem, size = 0x200, scoped, tag = 'scoped memory for tpu_custom_call.1']
  %s0 = inlined_call_operand.<no memory space> [shape: f32[1,1], index: 0, kind: input, shape index: {}]
  %s1 = inlined_call_operand.hbm [shape: f32[16,128], index: 1, kind: input, shape index: {}]
  %s2 = inlined_call_operand.hbm [shape: f32[16,128], index: 2, kind: input, shape index: {}]
  %s3 = inlined_call_operand.hbm [shape: bf16[128,128], index: 3, kind: input, shape index: {}]
  %s4 = inlined_call_operand.vmem [shape: f32[1,128], index: 4, kind: input, shape index: {}]
  %s5 = inlined_call_operand.hbm [shape: bf16[128,128], index: 5, kind: input, shape index: {}]
  %s6 = inlined_call_operand.vmem [shape: f32[1,128], index: 6, kind: input, shape index: {}]
  %s7 = inlined_call_operand.hbm [shape: f32[16,128], index: 7, kind: output, shape index: {0}]
  %s8 = inlined_call_operand.hbm [shape: f32[16,128], index: 8, kind: output, shape index: {1}]
  %9 = xla_tuple %s7, %s8
  %s10 = sld [smem:[#allocation0]]
  $region85: #{tpu_custom_call.1} parent=0
    _
  %s12 = ssub.s32 1, %s10
  %s13 = scalar_select 0, %s12, %s10
  %14 = sst [smem:[#allocation2]] %s0
  $region1: #{tpu_custom_call.1} parent=0
    #allocation3 [shape = 'u8[8192]{0}', space=vmem, size = 0x2000, scoped, tag = 'input window, operand 1']
    #allocation4 [shape = 's32[2]{0}', space=sflag, size = 0x8, scoped, tag = 'scoped memory for tpu_custom_call.1']
    #allocation5 [shape = 's32[2]{0}', space=sflag, size = 0x8, scoped, tag = 'scoped memory for tpu_custom_call.1']
    #allocation6 [shape = 'u8[8192]{0}', space=vmem, size = 0x2000, scoped, tag = 'input window, operand 2']
    #allocation7 [shape = 's32[2]{0}', space=sflag, size = 0x8, scoped, tag = 'scoped memory for tpu_custom_call.1']
    #allocation8 [shape = 'u8[32768]{0}', space=vmem, size = 0x8000, scoped, tag = 'input window, operand 3, single buffered']
    #allocation9 [shape = 'u8[32768]{0}', space=vmem, size = 0x8000, scoped, tag = 'input window, operand 5, single buffered']
    #allocation10 [shape = 's32[1]{0}', space=sflag, size = 0x4, scoped, tag = 'scoped memory for tpu_custom_call.1']
    #allocation11 [shape = 'u8[8192]{0}', space=vmem, size = 0x2000, scoped, tag = 'output window, operand 0']
    #allocation12 [shape = 'u8[8192]{0}', space=vmem, size = 0x2000, scoped, tag = 'output window, operand 1']
    #allocation13 [shape = 's32[2]{0}', space=sflag, size = 0x8, scoped, tag = 'scoped memory for tpu_custom_call.1']
    %15 = vsyncpa [#allocation4], 0
    %s16 = scalar_lea.sflag [#allocation4], 1
    %17 = vsyncpa %s16, 0
    %18 = vsyncpa [#allocation7], 0
    %s19 = scalar_lea.sflag [#allocation7], 1
    %20 = vsyncpa %s19, 0
    %21 = vsyncpa [#allocation10], 0
    %22 = vsyncpa [#allocation5], 0
    %s23 = scalar_lea.sflag [#allocation5], 1
    %24 = vsyncpa %s23, 0
    %25 = vsyncpa [#allocation13], 0
    %s26 = scalar_lea.sflag [#allocation13], 1
    %27 = vsyncpa %s26, 0
    loop: start=0, step=1, limit=4
    $region2: #{tpu_custom_call.1} parent=1 // loop_pre_header
      _
    $region3: #{tpu_custom_call.1} parent=1 // loop_header
      %s29 = sphi 0, %s33
      %p30 = scmp.ge.s32.totalorder %s29, 4
      %s37 = sphi 0, %s37
      %s39 = sphi 0, %s37
      %s40 = sphi 0, %s39
      %s54 = sphi 0, %s40
      %s60 = sphi 0, %s62
      %s63 = sphi 0, %s60
      %s64 = sphi 0, %s63
      %s80 = sphi 0, %s64
      %s86 = sphi 0, %s88
      %s89 = sphi 0, %s86
      %s90 = sphi 0, %s89
      %s106 = sphi 0, %s90
      %s110 = sphi 0, %s110
      %s112 = sphi 0, %s110
      %s113 = sphi 0, %s112
      %s127 = sphi 0, %s113
      %s131 = sphi 0, %s131
      %s133 = sphi 0, %s131
      %s134 = sphi 0, %s133
      %s148 = sphi 0, %s134
      %s152 = sphi 0, %s152
      %s154 = sphi 0, %s152
      %s155 = sphi 0, %s154
      %s169 = sphi 0, %s155
      %s173 = sphi 0, %s173
      %s175 = sphi 0, %s173
      %s176 = sphi 0, %s175
      %s190 = sphi 0, %s176
      %s196 = sphi 0, %s198
      %s199 = sphi 0, %s196
      %s200 = sphi 0, %s199
      %s216 = sphi 0, %s200
      %s222 = sphi 0, %s224
      %s225 = sphi 0, %s222
      %s226 = sphi 0, %s225
      %s242 = sphi 0, %s226
    $region4: #{tpu_custom_call.1} parent=1 // loop_header_branch
      %32 = sbr.rel (%p30) target = $region8
    $region5: #{tpu_custom_call.1} parent=1 // loop_body
      %s34 = ssub.s32 %s29, 1
      %s35 = ssub.s32 %s29, 2
      %s36 = sadd.s32 %s29, 1
      %s38 = sadd.s32 %s37, 1
      %p41 = scmp.eq.s32.totalorder %s29, 1
      %p42 = scmp.ne.s32.totalorder %s37, %s39
      %p43 = scmp.eq.s32.totalorder %s29, 0
      %p44 = por %p42, %p43
      %p45 = scmp.ne.s32.totalorder %s37, %s39
      %p46 = scmp.eq.s32.totalorder %s34, 1
      %p47 = por %p45, %p46
      %p48 = scmp.ne.s32.totalorder %s39, %s40
      %p49 = scmp.eq.s32.totalorder %s34, 0
      %p50 = por %p48, %p49
      %p51 = scmp.ne.s32.totalorder %s39, %s40
      %p52 = scmp.eq.s32.totalorder %s35, 1
      %p53 = por %p51, %p52
      %p55 = scmp.ne.s32.totalorder %s40, %s54
      %p56 = scmp.eq.s32.totalorder %s35, 0
      %p57 = por %p55, %p56
      %s58 = ssub.s32 %s29, %s36
      %p59 = scmp.eq.s32.totalorder %s58, 0
      %s61 = sadd.s32 %s60, 1
      %s62 = scalar_select %p59, %s60, %s61
      %p65 = pneg %p59
      %p66 = scmp.eq.s32.totalorder %s29, 1
      %p67 = por %p65, %p66
      %p68 = scmp.ne.s32.totalorder %s60, %s63
      %p69 = scmp.eq.s32.totalorder %s29, 0
      %p70 = por %p68, %p69
      %p71 = scmp.ne.s32.totalorder %s60, %s63
      %p72 = scmp.eq.s32.totalorder %s34, 1
      %p73 = por %p71, %p72
      %p74 = scmp.ne.s32.totalorder %s63, %s64
      %p75 = scmp.eq.s32.totalorder %s34, 0
      %p76 = por %p74, %p75
      %p77 = scmp.ne.s32.totalorder %s63, %s64
      %p78 = scmp.eq.s32.totalorder %s35, 1
      %p79 = por %p77, %p78
      %p81 = scmp.ne.s32.totalorder %s64, %s80
      %p82 = scmp.eq.s32.totalorder %s35, 0
      %p83 = por %p81, %p82
      %s84 = ssub.s32 %s29, %s36
      %p85 = scmp.eq.s32.totalorder %s84, 0
      %s87 = sadd.s32 %s86, 1
      %s88 = scalar_select %p85, %s86, %s87
      %p91 = pneg %p85
      %p92 = scmp.eq.s32.totalorder %s29, 1
      %p93 = por %p91, %p92
      %p94 = scmp.ne.s32.totalorder %s86, %s89
      %p95 = scmp.eq.s32.totalorder %s29, 0
      %p96 = por %p94, %p95
      %p97 = scmp.ne.s32.totalorder %s86, %s89
      %p98 = scmp.eq.s32.totalorder %s34, 1
      %p99 = por %p97, %p98
      %p100 = scmp.ne.s32.totalorder %s89, %s90
      %p101 = scmp.eq.s32.totalorder %s34, 0
      %p102 = por %p100, %p101
      %p103 = scmp.ne.s32.totalorder %s89, %s90
      %p104 = scmp.eq.s32.totalorder %s35, 1
      %p105 = por %p103, %p104
      %p107 = scmp.ne.s32.totalorder %s90, %s106
      %p108 = scmp.eq.s32.totalorder %s35, 0
      %p109 = por %p107, %p108
      %s111 = sadd.s32 %s110, 1
      %p114 = scmp.eq.s32.totalorder %s29, 1
      %p115 = scmp.ne.s32.totalorder %s110, %s112
      %p116 = scmp.eq.s32.totalorder %s29, 0
      %p117 = por %p115, %p116
      %p118 = scmp.ne.s32.totalorder %s110, %s112
      %p119 = scmp.eq.s32.totalorder %s34, 1
      %p120 = por %p118, %p119
      %p121 = scmp.ne.s32.totalorder %s112, %s113
      %p122 = scmp.eq.s32.totalorder %s34, 0
      %p123 = por %p121, %p122
      %p124 = scmp.ne.s32.totalorder %s112, %s113
      %p125 = scmp.eq.s32.totalorder %s35, 1
      %p126 = por %p124, %p125
      %p128 = scmp.ne.s32.totalorder %s113, %s127
      %p129 = scmp.eq.s32.totalorder %s35, 0
      %p130 = por %p128, %p129
      %s132 = sadd.s32 %s131, 1
      %p135 = scmp.eq.s32.totalorder %s29, 1
      %p136 = scmp.ne.s32.totalorder %s131, %s133
      %p137 = scmp.eq.s32.totalorder %s29, 0
      %p138 = por %p136, %p137
      %p139 = scmp.ne.s32.totalorder %s131, %s133
      %p140 = scmp.eq.s32.totalorder %s34, 1
      %p141 = por %p139, %p140
      %p142 = scmp.ne.s32.totalorder %s133, %s134
      %p143 = scmp.eq.s32.totalorder %s34, 0
      %p144 = por %p142, %p143
      %p145 = scmp.ne.s32.totalorder %s133, %s134
      %p146 = scmp.eq.s32.totalorder %s35, 1
      %p147 = por %p145, %p146
      %p149 = scmp.ne.s32.totalorder %s134, %s148
      %p150 = scmp.eq.s32.totalorder %s35, 0
      %p151 = por %p149, %p150
      %s153 = sadd.s32 %s152, 1
      %p156 = scmp.eq.s32.totalorder %s29, 1
      %p157 = scmp.ne.s32.totalorder %s152, %s154
      %p158 = scmp.eq.s32.totalorder %s29, 0
      %p159 = por %p157, %p158
      %p160 = scmp.ne.s32.totalorder %s152, %s154
      %p161 = scmp.eq.s32.totalorder %s34, 1
      %p162 = por %p160, %p161
      %p163 = scmp.ne.s32.totalorder %s154, %s155
      %p164 = scmp.eq.s32.totalorder %s34, 0
      %p165 = por %p163, %p164
      %p166 = scmp.ne.s32.totalorder %s154, %s155
      %p167 = scmp.eq.s32.totalorder %s35, 1
      %p168 = por %p166, %p167
      %p170 = scmp.ne.s32.totalorder %s155, %s169
      %p171 = scmp.eq.s32.totalorder %s35, 0
      %p172 = por %p170, %p171
      %s174 = sadd.s32 %s173, 1
      %p177 = scmp.eq.s32.totalorder %s29, 1
      %p178 = scmp.ne.s32.totalorder %s173, %s175
      %p179 = scmp.eq.s32.totalorder %s29, 0
      %p180 = por %p178, %p179
      %p181 = scmp.ne.s32.totalorder %s173, %s175
      %p182 = scmp.eq.s32.totalorder %s34, 1
      %p183 = por %p181, %p182
      %p184 = scmp.ne.s32.totalorder %s175, %s176
      %p185 = scmp.eq.s32.totalorder %s34, 0
      %p186 = por %p184, %p185
      %p187 = scmp.ne.s32.totalorder %s175, %s176
      %p188 = scmp.eq.s32.totalorder %s35, 1
      %p189 = por %p187, %p188
      %p191 = scmp.ne.s32.totalorder %s176, %s190
      %p192 = scmp.eq.s32.totalorder %s35, 0
      %p193 = por %p191, %p192
      %s194 = ssub.s32 %s29, %s36
      %p195 = scmp.eq.s32.totalorder %s194, 0
      %s197 = sadd.s32 %s196, 1
      %s198 = scalar_select %p195, %s196, %s197
      %p201 = pneg %p195
      %p202 = scmp.eq.s32.totalorder %s29, 1
      %p203 = por %p201, %p202
      %p204 = scmp.ne.s32.totalorder %s196, %s199
      %p205 = scmp.eq.s32.totalorder %s29, 0
      %p206 = por %p204, %p205
      %p207 = scmp.ne.s32.totalorder %s196, %s199
      %p208 = scmp.eq.s32.totalorder %s34, 1
      %p209 = por %p207, %p208
      %p210 = scmp.ne.s32.totalorder %s199, %s200
      %p211 = scmp.eq.s32.totalorder %s34, 0
      %p212 = por %p210, %p211
      %p213 = scmp.ne.s32.totalorder %s199, %s200
      %p214 = scmp.eq.s32.totalorder %s35, 1
      %p215 = por %p213, %p214
      %p217 = scmp.ne.s32.totalorder %s200, %s216
      %p218 = scmp.eq.s32.totalorder %s35, 0
      %p219 = por %p217, %p218
      %s220 = ssub.s32 %s29, %s36
      %p221 = scmp.eq.s32.totalorder %s220, 0
      %s223 = sadd.s32 %s222, 1
      %s224 = scalar_select %p221, %s222, %s223
      %p227 = pneg %p221
      %p228 = scmp.eq.s32.totalorder %s29, 1
      %p229 = por %p227, %p228
      %p230 = scmp.ne.s32.totalorder %s222, %s225
      %p231 = scmp.eq.s32.totalorder %s29, 0
      %p232 = por %p230, %p231
      %p233 = scmp.ne.s32.totalorder %s222, %s225
      %p234 = scmp.eq.s32.totalorder %s34, 1
      %p235 = por %p233, %p234
      %p236 = scmp.ne.s32.totalorder %s225, %s226
      %p237 = scmp.eq.s32.totalorder %s34, 0
      %p238 = por %p236, %p237
      %p239 = scmp.ne.s32.totalorder %s225, %s226
      %p240 = scmp.eq.s32.totalorder %s35, 1
      %p241 = por %p239, %p240
      %p243 = scmp.ne.s32.totalorder %s226, %s242
      %p244 = scmp.eq.s32.totalorder %s35, 0
      %p245 = por %p243, %p244
      %p246 = scmp.le.s32.totalorder 1, %s29
      %p247 = scmp.lt.s32.totalorder %s29, 3
      %p248 = pnand %p246, %p247
      %p249 = pneg %p248
      // Predicated region
      $region9: #{tpu_custom_call.1} parent=5 // pred_check
        _
      $region10: #{tpu_custom_call.1} parent=5 // pred_check_branch
        %251 = sbr.rel (%p248) target = $region12
      $region11: #{tpu_custom_call.1} parent=5 // pred_region
        %s252 = ssub.s32 %s29, 1
        // Predicated region
        $region13: #{tpu_custom_call.1} parent=11 // pred_check
          %p253 = pneg %p50
        $region14: #{tpu_custom_call.1} parent=11 // pred_check_branch
          %255 = sbr.rel (%p253) target = $region16
        $region15: #{tpu_custom_call.1} parent=11 // pred_region
          _
        $region16: #{tpu_custom_call.1} parent=11 // pred_fallthru
          _
        // Predicated region
        $region17: #{tpu_custom_call.1} parent=11 // pred_check
          %p256 = pneg %p123
        $region18: #{tpu_custom_call.1} parent=11 // pred_check_branch
          %258 = sbr.rel (%p256) target = $region20
        $region19: #{tpu_custom_call.1} parent=11 // pred_region
          %260 = vsyncadd [#allocation7], 0
          %s261 = sshll.u32 %s3, 4
          %s262 = int_to_ptr.hbm [resolvable:$true] %s261
          %s263 = sshll.u32 [#allocation8], 4
          %s264 = int_to_ptr.vmem [resolvable:$true] %s263
          %269 = dma.hbm_to_vmem [thread:$0]  %s262, 1024, %s264, [#allocation7], 64, 64, 4
        $region20: #{tpu_custom_call.1} parent=11 // pred_fallthru
          _
        // Predicated region
        $region21: #{tpu_custom_call.1} parent=11 // pred_check
          %p270 = pneg %p144
        $region22: #{tpu_custom_call.1} parent=11 // pred_check_branch
          %272 = sbr.rel (%p270) target = $region24
        $region23: #{tpu_custom_call.1} parent=11 // pred_region
          _
        $region24: #{tpu_custom_call.1} parent=11 // pred_fallthru
          _
        // Predicated region
        $region25: #{tpu_custom_call.1} parent=11 // pred_check
          %p273 = pneg %p165
        $region26: #{tpu_custom_call.1} parent=11 // pred_check_branch
          %275 = sbr.rel (%p273) target = $region28
        $region27: #{tpu_custom_call.1} parent=11 // pred_region
          %277 = vsyncadd [#allocation10], 0
          %s278 = sshll.u32 %s5, 4
          %s279 = int_to_ptr.hbm [resolvable:$true] %s278
          %s280 = sshll.u32 [#allocation9], 4
          %s281 = int_to_ptr.vmem [resolvable:$true] %s280
          %286 = dma.hbm_to_vmem [thread:$0]  %s279, 1024, %s281, [#allocation10], 64, 64, 4
        $region28: #{tpu_custom_call.1} parent=11 // pred_fallthru
          _
        // Predicated region
        $region29: #{tpu_custom_call.1} parent=11 // pred_check
          %p287 = pneg %p186
        $region30: #{tpu_custom_call.1} parent=11 // pred_check_branch
          %289 = sbr.rel (%p287) target = $region32
        $region31: #{tpu_custom_call.1} parent=11 // pred_region
          _
        $region32: #{tpu_custom_call.1} parent=11 // pred_fallthru
          _
      $region12: #{tpu_custom_call.1} parent=5 // pred_fallthru
        _
      %p290 = scmp.lt.s32.totalorder %s29, 2
      // Predicated region
      $region33: #{tpu_custom_call.1} parent=5 // pred_check
        %p291 = pneg %p290
      $region34: #{tpu_custom_call.1} parent=5 // pred_check_branch
        %293 = sbr.rel (%p291) target = $region36
      $region35: #{tpu_custom_call.1} parent=5 // pred_region
        // Predicated region
        $region37: #{tpu_custom_call.1} parent=35 // pred_check
          %p294 = pneg %p70
        $region38: #{tpu_custom_call.1} parent=35 // pred_check_branch
          %296 = sbr.rel (%p294) target = $region40
        $region39: #{tpu_custom_call.1} parent=35 // pred_region
          %s297 = sand.u32 %s60, 1
          %s298 = scalar_lea.sflag [#allocation4], %s297
          %s299 = sand.u32 %s60, 1
          %s300 = smul.addr %s299, 8
          %s301 = scalar_lea.vmem [#allocation3], %s300
          %303 = vsyncadd %s298, 0
          %s304 = smul.addr %s29, 8
          %s305 = scalar_lea.hbm %s1, %s304
          %s307 = sshll.u32 %s305, 4
          %s308 = int_to_ptr.hbm [resolvable:$true] %s307
          %s309 = sshll.u32 %s301, 4
          %s310 = int_to_ptr.vmem [resolvable:$true] %s309
          %312 = dma.hbm_to_vmem [thread:$0]  %s308, 128, %s310, %s298
        $region40: #{tpu_custom_call.1} parent=35 // pred_fallthru
          _
        // Predicated region
        $region41: #{tpu_custom_call.1} parent=35 // pred_check
          %p313 = pneg %p96
        $region42: #{tpu_custom_call.1} parent=35 // pred_check_branch
          %315 = sbr.rel (%p313) target = $region44
        $region43: #{tpu_custom_call.1} parent=35 // pred_region
          %s316 = sand.u32 %s29, 1
          %s317 = scalar_lea.sflag [#allocation7], %s316
          %s318 = sand.u32 %s86, 1
          %s319 = smul.addr %s318, 8
          %s320 = scalar_lea.vmem [#allocation6], %s319
          %322 = vsyncadd %s317, 0
          %s323 = smul.addr %s29, 8
          %s324 = scalar_lea.hbm %s2, %s323
          %s326 = sshll.u32 %s324, 4
          %s327 = int_to_ptr.hbm [resolvable:$true] %s326
          %s328 = sshll.u32 %s320, 4
          %s329 = int_to_ptr.vmem [resolvable:$true] %s328
          %331 = dma.hbm_to_vmem [thread:$0]  %s327, 128, %s329, %s317
        $region44: #{tpu_custom_call.1} parent=35 // pred_fallthru
          _
      $region36: #{tpu_custom_call.1} parent=5 // pred_fallthru
        _
      %p332 = scmp.le.s32.totalorder 1, %s29
      %p333 = scmp.lt.s32.totalorder %s29, 3
      %p334 = pnand %p332, %p333
      %p335 = pneg %p334
      // Predicated region
      $region45: #{tpu_custom_call.1} parent=5 // pred_check
        _
      $region46: #{tpu_custom_call.1} parent=5 // pred_check_branch
        %337 = sbr.rel (%p334) target = $region48
      $region47: #{tpu_custom_call.1} parent=5 // pred_region
        %s338 = ssub.s32 %s29, 1
        %s339 = sand.u32 %s63, 1
        %s340 = scalar_lea.sflag [#allocation4], %s339
        %s341 = sand.u32 %s63, 1
        %s342 = smul.addr %s341, 8
        %s343 = scalar_lea.vmem [#allocation3], %s342
        // Predicated region
        $region49: #{tpu_custom_call.1} parent=47 // pred_check
          %p344 = pneg %p76
        $region50: #{tpu_custom_call.1} parent=47 // pred_check_branch
          %346 = sbr.rel (%p344) target = $region52
        $region51: #{tpu_custom_call.1} parent=47 // pred_region
          %348 = dma.done %s340, 128
        $region52: #{tpu_custom_call.1} parent=47 // pred_fallthru
          _
        %s349 = sand.u32 %s34, 1
        %s350 = scalar_lea.sflag [#allocation7], %s349
        %s351 = sand.u32 %s89, 1
        %s352 = smul.addr %s351, 8
        %s353 = scalar_lea.vmem [#allocation6], %s352
        // Predicated region
        $region53: #{tpu_custom_call.1} parent=47 // pred_check
          %p354 = pneg %p102
        $region54: #{tpu_custom_call.1} parent=47 // pred_check_branch
          %356 = sbr.rel (%p354) target = $region56
        $region55: #{tpu_custom_call.1} parent=47 // pred_region
          %358 = dma.done %s350, 128
        $region56: #{tpu_custom_call.1} parent=47 // pred_fallthru
          _
        // Predicated region
        $region57: #{tpu_custom_call.1} parent=47 // pred_check
          %p359 = pneg %p123
        $region58: #{tpu_custom_call.1} parent=47 // pred_check_branch
          %361 = sbr.rel (%p359) target = $region60
        $region59: #{tpu_custom_call.1} parent=47 // pred_region
          %363 = dma.done [#allocation7], 1024
        $region60: #{tpu_custom_call.1} parent=47 // pred_fallthru
          _
        // Predicated region
        $region61: #{tpu_custom_call.1} parent=47 // pred_check
          %p364 = pneg %p165
        $region62: #{tpu_custom_call.1} parent=47 // pred_check_branch
          %366 = sbr.rel (%p364) target = $region64
        $region63: #{tpu_custom_call.1} parent=47 // pred_region
          %368 = dma.done [#allocation10], 1024
        $region64: #{tpu_custom_call.1} parent=47 // pred_fallthru
          _
        %p369 = pneg %p50
        %p370 = pneg %p47
        %s371 = sand.u32 %s63, 1
        %s372 = scalar_lea.sflag [#allocation4], %s371
        %s373 = sand.u32 %s63, 1
        %s374 = smul.addr %s373, 8
        %s375 = scalar_lea.vmem [#allocation3], %s374
        %p376 = pneg %p76
        %p377 = pneg %p73
        %s378 = sand.u32 %s34, 1
        %s379 = scalar_lea.sflag [#allocation7], %s378
        %s380 = sand.u32 %s89, 1
        %s381 = smul.addr %s380, 8
        %s382 = scalar_lea.vmem [#allocation6], %s381
        %p383 = pneg %p102
        %p384 = pneg %p99
        %p385 = pneg %p123
        %p386 = pneg %p120
        %p387 = pneg %p144
        %p388 = pneg %p141
        %p389 = pneg %p165
        %p390 = pneg %p162
        %p391 = pneg %p186
        %p392 = pneg %p183
        %p393 = pneg %p212
        %p394 = pneg %p209
        %s395 = sand.u32 %s199, 1
        %s396 = scalar_lea.sflag [#allocation5], %s395
        %s397 = sand.u32 %s199, 1
        %s398 = smul.addr %s397, 8
        %s399 = scalar_lea.vmem [#allocation11], %s398
        %p400 = pneg %p238
        %p401 = pneg %p235
        %s402 = sand.u32 %s225, 1
        %s403 = scalar_lea.sflag [#allocation13], %s402
        %s404 = sand.u32 %s225, 1
        %s405 = smul.addr %s404, 8
        %s406 = scalar_lea.vmem [#allocation12], %s405
        %s407 = sld [smem:[#allocation2]]
        %s408 = ssub.f32 1.0, %s407
        %v409 = vld [vmem:[%s343] sm:$0xff]
        %v410 = vld [vmem:[%s353] sm:$0xff]
        %v411 = vpack.c.bf16 %v409, %v409
        %v412 = vld [vmem:[#allocation8] sm:$0xf]
        %v413 = vld [vmem:[#allocation8 + $0x4] sm:$0xf]
        %v414 = vld [vmem:[#allocation8 + $0x8] sm:$0xf]
        %v415 = vld [vmem:[#allocation8 + $0xc] sm:$0xf]
        %v416 = vld [vmem:[#allocation8 + $0x10] sm:$0xf]
        %v417 = vld [vmem:[#allocation8 + $0x14] sm:$0xf]
        %v418 = vld [vmem:[#allocation8 + $0x18] sm:$0xf]
        %v419 = vld [vmem:[#allocation8 + $0x1c] sm:$0xf]
        %v420 = vld [vmem:[#allocation8 + $0x20] sm:$0xf]
        %v421 = vld [vmem:[#allocation8 + $0x24] sm:$0xf]
        %v422 = vld [vmem:[#allocation8 + $0x28] sm:$0xf]
        %v423 = vld [vmem:[#allocation8 + $0x2c] sm:$0xf]
        %v424 = vld [vmem:[#allocation8 + $0x30] sm:$0xf]
        %v425 = vld [vmem:[#allocation8 + $0x34] sm:$0xf]
        %v426 = vld [vmem:[#allocation8 + $0x38] sm:$0xf]
        %v427 = vld [vmem:[#allocation8 + $0x3c] sm:$0xf]
        %v428 = vld [vmem:[%s4] sm:$0x1]
        %v430 = vperm.slane %v428, 0
        %v448 = vunpack.c.l.b16 %v412
        %v449 = vunpack.c.l.b16 %v413
        %v450 = vunpack.c.l.b16 %v414
        %v451 = vunpack.c.l.b16 %v415
        %v452 = vunpack.c.l.b16 %v416
        %v453 = vunpack.c.l.b16 %v417
        %v454 = vunpack.c.l.b16 %v418
        %v455 = vunpack.c.l.b16 %v419
        %v456 = vunpack.c.l.b16 %v420
        %v457 = vunpack.c.l.b16 %v421
        %v458 = vunpack.c.l.b16 %v422
        %v459 = vunpack.c.l.b16 %v423
        %v460 = vunpack.c.l.b16 %v424
        %v461 = vunpack.c.l.b16 %v425
        %v462 = vunpack.c.l.b16 %v426
        %v463 = vunpack.c.l.b16 %v427
        %v464 = vpack.c.b16 %v449, %v448
        %v465 = vpack.c.b16 %v451, %v450
        %v466 = vpack.c.b16 %v453, %v452
        %v467 = vpack.c.b16 %v455, %v454
        %v468 = vpack.c.b16 %v457, %v456
        %v469 = vpack.c.b16 %v459, %v458
        %v470 = vpack.c.b16 %v461, %v460
        %v471 = vpack.c.b16 %v463, %v462
        %480 = vmatpush.bf16.msra.mxu0 %v471
        %481 = vmatpush.bf16.msra.mxu0 %v470
        %482 = vmatpush.bf16.msra.mxu0 %v469
        %483 = vmatpush.bf16.msra.mxu0 %v468
        %484 = vmatpush.bf16.msra.mxu0 %v467
        %485 = vmatpush.bf16.msra.mxu0 %v466
        %486 = vmatpush.bf16.msra.mxu0 %v465
        %487 = vmatpush.bf16.msra.mxu0 %v464
        %488 = vmatmul.bf16.gmra.mxu0 %v411
        %v489 = vpop.f32.mrf.mxu0
        %v490 = vadd.f32 %v430, %v489
        %v491 = vpop.f32.mrf.mxu0
        %492 = vdwg.mxu0
        %v493 = vpack.c.bf16 %v410, %v410
        %v494 = vld [vmem:[#allocation9] sm:$0xf]
        %v495 = vld [vmem:[#allocation9 + $0x4] sm:$0xf]
        %v496 = vld [vmem:[#allocation9 + $0x8] sm:$0xf]
        %v497 = vld [vmem:[#allocation9 + $0xc] sm:$0xf]
        %v498 = vld [vmem:[#allocation9 + $0x10] sm:$0xf]
        %v499 = vld [vmem:[#allocation9 + $0x14] sm:$0xf]
        %v500 = vld [vmem:[#allocation9 + $0x18] sm:$0xf]
        %v501 = vld [vmem:[#allocation9 + $0x1c] sm:$0xf]
        %v502 = vld [vmem:[#allocation9 + $0x20] sm:$0xf]
        %v503 = vld [vmem:[#allocation9 + $0x24] sm:$0xf]
        %v504 = vld [vmem:[#allocation9 + $0x28] sm:$0xf]
        %v505 = vld [vmem:[#allocation9 + $0x2c] sm:$0xf]
        %v506 = vld [vmem:[#allocation9 + $0x30] sm:$0xf]
        %v507 = vld [vmem:[#allocation9 + $0x34] sm:$0xf]
        %v508 = vld [vmem:[#allocation9 + $0x38] sm:$0xf]
        %v509 = vld [vmem:[#allocation9 + $0x3c] sm:$0xf]
        %v510 = vld [vmem:[%s6] sm:$0x1]
        %v512 = vperm.slane %v510, 0
        %v530 = vunpack.c.l.b16 %v494
        %v531 = vunpack.c.l.b16 %v495
        %v532 = vunpack.c.l.b16 %v496
        %v533 = vunpack.c.l.b16 %v497
        %v534 = vunpack.c.l.b16 %v498
        %v535 = vunpack.c.l.b16 %v499
        %v536 = vunpack.c.l.b16 %v500
        %v537 = vunpack.c.l.b16 %v501
        %v538 = vunpack.c.l.b16 %v502
        %v539 = vunpack.c.l.b16 %v503
        %v540 = vunpack.c.l.b16 %v504
        %v541 = vunpack.c.l.b16 %v505
        %v542 = vunpack.c.l.b16 %v506
        %v543 = vunpack.c.l.b16 %v507
        %v544 = vunpack.c.l.b16 %v508
        %v545 = vunpack.c.l.b16 %v509
        %v546 = vpack.c.b16 %v531, %v530
        %v547 = vpack.c.b16 %v533, %v532
        %v548 = vpack.c.b16 %v535, %v534
        %v549 = vpack.c.b16 %v537, %v536
        %v550 = vpack.c.b16 %v539, %v538
        %v551 = vpack.c.b16 %v541, %v540
        %v552 = vpack.c.b16 %v543, %v542
        %v553 = vpack.c.b16 %v545, %v544
        %562 = vmatpush.bf16.msra.mxu0 %v553
        %563 = vmatpush.bf16.msra.mxu0 %v552
        %564 = vmatpush.bf16.msra.mxu0 %v551
        %565 = vmatpush.bf16.msra.mxu0 %v550
        %566 = vmatpush.bf16.msra.mxu0 %v549
        %567 = vmatpush.bf16.msra.mxu0 %v548
        %568 = vmatpush.bf16.msra.mxu0 %v547
        %569 = vmatpush.bf16.msra.mxu0 %v546
        %570 = vmatmul.bf16.gmra.mxu0 %v493
        %v571 = vpop.f32.mrf.mxu0
        %v572 = vadd.f32 %v512, %v571
        %v573 = vpop.f32.mrf.mxu0
        %574 = vdwg.mxu0
        %v575 = vstv %s407
        %v576 = vmul.f32 %v575, %v572
        %v577 = vadd.f32 %v409, %v576
        %578 = vst [vmem:[%s399] sm:$0xff] %v577
        %v579 = vstv %s408
        %v580 = vmul.f32 %v579, %v490
        %v581 = vadd.f32 %v410, %v580
        %582 = vst [vmem:[%s406] sm:$0xff] %v581
        %s583 = sand.u32 %s199, 1
        %s584 = scalar_lea.sflag [#allocation5], %s583
        %s585 = sand.u32 %s199, 1
        %s586 = smul.addr %s585, 8
        %s587 = scalar_lea.vmem [#allocation11], %s586
        %s588 = sand.u32 %s225, 1
        %s589 = scalar_lea.sflag [#allocation13], %s588
        %s590 = sand.u32 %s225, 1
        %s591 = smul.addr %s590, 8
        %s592 = scalar_lea.vmem [#allocation12], %s591
        // Predicated region
        $region65: #{tpu_custom_call.1} parent=47 // pred_check
          %p593 = pneg %p209
        $region66: #{tpu_custom_call.1} parent=47 // pred_check_branch
          %595 = sbr.rel (%p593) target = $region68
        $region67: #{tpu_custom_call.1} parent=47 // pred_region
          %597 = vsyncadd %s584, 0
          %s598 = smul.addr %s34, 8
          %s599 = scalar_lea.hbm %s7, %s598
          %s601 = sshll.u32 %s587, 4
          %s602 = int_to_ptr.vmem [resolvable:$true] %s601
          %s603 = sshll.u32 %s599, 4
          %s604 = int_to_ptr.hbm [resolvable:$true] %s603
          %606 = dma.vmem_to_hbm [thread:$0]  %s602, 128, %s604, %s584
        $region68: #{tpu_custom_call.1} parent=47 // pred_fallthru
          _
        // Predicated region
        $region69: #{tpu_custom_call.1} parent=47 // pred_check
          %p607 = pneg %p235
        $region70: #{tpu_custom_call.1} parent=47 // pred_check_branch
          %609 = sbr.rel (%p607) target = $region72
        $region71: #{tpu_custom_call.1} parent=47 // pred_region
          %611 = vsyncadd %s589, 0
          %s612 = smul.addr %s34, 8
          %s613 = scalar_lea.hbm %s8, %s612
          %s615 = sshll.u32 %s592, 4
          %s616 = int_to_ptr.vmem [resolvable:$true] %s615
          %s617 = sshll.u32 %s613, 4
          %s618 = int_to_ptr.hbm [resolvable:$true] %s617
          %620 = dma.vmem_to_hbm [thread:$0]  %s616, 128, %s618, %s589
        $region72: #{tpu_custom_call.1} parent=47 // pred_fallthru
          _
      $region48: #{tpu_custom_call.1} parent=5 // pred_fallthru
        _
      %p621 = scmp.le.s32.totalorder 2, %s29
      // Predicated region
      $region73: #{tpu_custom_call.1} parent=5 // pred_check
        %p622 = pneg %p621
      $region74: #{tpu_custom_call.1} parent=5 // pred_check_branch
        %624 = sbr.rel (%p622) target = $region76
      $region75: #{tpu_custom_call.1} parent=5 // pred_region
        %s625 = ssub.s32 %s29, 2
        // Predicated region
        $region77: #{tpu_custom_call.1} parent=75 // pred_check
          %p626 = pneg %p215
        $region78: #{tpu_custom_call.1} parent=75 // pred_check_branch
          %628 = sbr.rel (%p626) target = $region80
        $region79: #{tpu_custom_call.1} parent=75 // pred_region
          %s629 = sand.u32 %s200, 1
          %s630 = scalar_lea.sflag [#allocation5], %s629
          %s631 = sand.u32 %s200, 1
          %s632 = smul.addr %s631, 8
          %s633 = scalar_lea.vmem [#allocation11], %s632
          %635 = dma.done %s630, 128
        $region80: #{tpu_custom_call.1} parent=75 // pred_fallthru
          _
        // Predicated region
        $region81: #{tpu_custom_call.1} parent=75 // pred_check
          %p636 = pneg %p241
        $region82: #{tpu_custom_call.1} parent=75 // pred_check_branch
          %638 = sbr.rel (%p636) target = $region84
        $region83: #{tpu_custom_call.1} parent=75 // pred_region
          %s639 = sand.u32 %s226, 1
          %s640 = scalar_lea.sflag [#allocation13], %s639
          %s641 = sand.u32 %s226, 1
          %s642 = smul.addr %s641, 8
          %s643 = scalar_lea.vmem [#allocation12], %s642
          %645 = dma.done %s640, 128
        $region84: #{tpu_custom_call.1} parent=75 // pred_fallthru
          _
      $region76: #{tpu_custom_call.1} parent=5 // pred_fallthru
        _
    $region6: #{tpu_custom_call.1} parent=1 // loop_footer
      %s33 = sadd.s32 1, %s29
    $region7: #{tpu_custom_call.1} parent=1 // loop_footer_branch
      %28 = sbr.rel target = $region3
    $region8: #{tpu_custom_call.1} parent=1 // loop_exit
      _
    %646 = vsyncpa [#allocation4], 1
    %s647 = scalar_lea.sflag [#allocation4], 1
    %648 = vsyncpa %s647, 1
    %649 = vsyncpa [#allocation7], 1
    %s650 = scalar_lea.sflag [#allocation7], 1
    %651 = vsyncpa %s650, 1
    %652 = vsyncpa [#allocation10], 1
    %653 = vsyncpa [#allocation5], 1
    %s654 = scalar_lea.sflag [#allocation5], 1
    %655 = vsyncpa %s654, 1
    %656 = vsyncpa [#allocation13], 1
    %s657 = scalar_lea.sflag [#allocation13], 1
    %658 = vsyncpa %s657, 1

</llo_original>
